<compile_context>
chip_gen: v5e
topology: v5e:2x2
jax: 0.10.0
libtpu: 0.0.40
codegen_flags: <defaults>
</compile_context>

<pallas_src>
import functools

import jax
import jax.numpy as jnp
from jax import lax
from jax.experimental import pallas as pl
from jax.experimental.pallas import tpu as pltpu

_LANES = 128
_F32_BYTES = 4
# ~8 MiB blocks: per-grid-step overhead (~0.35us) stays <10% of DMA time even
# at v7x HBM bandwidth; double-buffered blocks + f32 temporaries stay well
# under the scoped-VMEM limit below on every chip (v7x physical VMEM = 64 MiB).
_TARGET_BLOCK_BYTES = 8 * 1024 * 1024
_VMEM_LIMIT_BYTES = 48 * 1024 * 1024


def _cdiv(a: int, b: int) -> int:
    return -(-a // b)


def _round_up(a: int, m: int) -> int:
    return _cdiv(a, m) * m


def _pick_batch_tile(b: int, per_batch_bytes: int) -> int:
    """Largest divisor of b whose block fits the target budget, while keeping
    at least 2 batch groups (when b > 1) so both v7x TensorCores get work."""
    bb = 1
    for cand in range(1, b + 1):
        if b % cand:
            continue
        if cand * per_batch_bytes > _TARGET_BLOCK_BYTES:
            continue
        if b > 1 and b // cand < 2:
            continue
        bb = cand
    return bb


# ----------------------------------------------------------------------------
# Fused single-pass kernel: whole (bb, 3, rows, 128) batch block resident in
# VMEM; per-channel means computed in-kernel -> one HBM read of x total.
# ----------------------------------------------------------------------------
def _sa_fused_kernel(x_ref, o_ref, *, hw, mask_tail):
    # x_ref: (bb, 3, rows, 128) input block (input dtype, upcast here)
    # o_ref: (1, 1, 128) lane-dense per-batch-group partial sum (f32)
    bb, _, rows, _ = x_ref.shape

    if mask_tail:
        row = lax.broadcasted_iota(jnp.int32, (rows, _LANES), 0)
        lane = lax.broadcasted_iota(jnp.int32, (rows, _LANES), 1)
        valid = row * _LANES + lane < hw

    partial = jnp.zeros((1, _LANES), jnp.float32)
    for j in range(bb):  # static unroll over packed batch elements
        xr = x_ref[j, 0].astype(jnp.float32)
        xg = x_ref[j, 1].astype(jnp.float32)
        xb = x_ref[j, 2].astype(jnp.float32)
        # Fused per-channel spatial means (padded lanes are zero -> sums ok).
        mr = jnp.sum(xr) / hw
        mg = jnp.sum(xg) / hw
        mb = jnp.sum(xb) / hw
        dr = xr - mr
        dg = xg - mg
        db = xb - mb
        k = jnp.sqrt(dr * dr + dg * dg + db * db)
        if mask_tail:
            k = jnp.where(valid, k, 0.0)
        # Per-element lane-partial accumulation (no full-tile acc temp).
        partial = partial + jnp.sum(k, axis=0, keepdims=True)

    o_ref[...] = partial.reshape(1, 1, _LANES)


def _sa_loss_fused(xf, hw, rows):
    b, c, _ = xf.shape
    pad = rows * _LANES - hw
    if pad:
        xf = jnp.pad(xf, ((0, 0), (0, 0), (0, pad)))
    xr = xf.reshape(b, c, rows, _LANES)

    # Budget in f32-equivalent bytes so in-kernel f32 temporaries stay bounded
    # even for bf16/fp16 inputs.
    per_batch_bytes = c * rows * _LANES * _F32_BYTES
    bb = _pick_batch_tile(b, per_batch_bytes)
    n_groups = b // bb

    kernel = functools.partial(_sa_fused_kernel, hw=hw, mask_tail=pad > 0)
    return pl.pallas_call(
        kernel,
        out_shape=jax.ShapeDtypeStruct((n_groups, 1, _LANES), jnp.float32),
        grid_spec=pltpu.PrefetchScalarGridSpec(
            num_scalar_prefetch=0,
            grid=(n_groups,),
            in_specs=[pl.BlockSpec((bb, c, rows, _LANES),
                                   lambda g: (g, 0, 0, 0))],
            out_specs=pl.BlockSpec((1, 1, _LANES), lambda g: (g, 0, 0)),
        ),
        compiler_params=pltpu.CompilerParams(
            dimension_semantics=("parallel",),
            vmem_limit_bytes=_VMEM_LIMIT_BYTES,
        ),
    )(xr)


# ----------------------------------------------------------------------------
# Tiled two-pass fallback for images too large to hold resident:
# means precomputed (scalar-prefetched into SMEM), spatial axis tiled in
# ~8 MiB blocks, partials accumulated in VMEM scratch, stored on last tile.
# ----------------------------------------------------------------------------
def _sa_tiled_kernel(means_ref, x_ref, o_ref, acc_ref, *, hw, mask_tail):
    # means_ref: (B*3,) f32 in SMEM (scalar-prefetched per-batch channel means)
    # x_ref:     (1, 3, t_rows, 128) input tile
    # o_ref:     (1, 1, 1, 128) per-(batch, parallel-slice) partial sum
    # acc_ref:   (1, 128) f32 VMEM scratch accumulator
    g = pl.program_id(0)
    p = pl.program_id(1)
    t = pl.program_id(2)
    n_t = pl.num_programs(2)
    t_rows = x_ref.shape[2]

    @pl.when(t == 0)
    def _():
        acc_ref[...] = jnp.zeros_like(acc_ref)

    base = 3 * g
    dr = x_ref[0, 0].astype(jnp.float32) - means_ref[base]
    dg = x_ref[0, 1].astype(jnp.float32) - means_ref[base + 1]
    db = x_ref[0, 2].astype(jnp.float32) - means_ref[base + 2]
    k = jnp.sqrt(dr * dr + dg * dg + db * db)
    if mask_tail:
        row = lax.broadcasted_iota(jnp.int32, (t_rows, _LANES), 0)
        lane = lax.broadcasted_iota(jnp.int32, (t_rows, _LANES), 1)
        row_off = (p * n_t + t) * t_rows
        k = jnp.where((row_off + row) * _LANES + lane < hw, k, 0.0)
    acc_ref[...] += jnp.sum(k, axis=0, keepdims=True)

    @pl.when(t == n_t - 1)
    def _():
        o_ref[...] = acc_ref[...].reshape(1, 1, 1, _LANES)


def _sa_loss_tiled(xf, hw, rows):
    b, c, _ = xf.shape
    # Cheap streaming XLA pre-pass for the means (f32 accumulation, narrow
    # dtype stays in HBM; zero padding does not change the sums).
    means = (jnp.sum(xf, axis=2, dtype=jnp.float32) / hw).reshape(-1)
    means = means.astype(jnp.float32)  # (B*3,)

    n_par = 2 if b == 1 else 1  # keep >=2 parallel grid steps for v7x megacore
    target_rows = max(8, (_TARGET_BLOCK_BYTES // (c * _LANES * _F32_BYTES)) // 8 * 8)
    n_tiles = _cdiv(rows, n_par * target_rows)
    t_rows = _round_up(_cdiv(rows, n_par * n_tiles), 8)
    rows_padded = n_par * n_tiles * t_rows

    pad = rows_padded * _LANES - hw
    if pad:
        xf = jnp.pad(xf, ((0, 0), (0, 0), (0, pad)))
    xr = xf.reshape(b, c, rows_padded, _LANES)

    kernel = functools.partial(_sa_tiled_kernel, hw=hw, mask_tail=pad > 0)
    return pl.pallas_call(
        kernel,
        out_shape=jax.ShapeDtypeStruct((b, n_par, 1, _LANES), jnp.float32),
        grid_spec=pltpu.PrefetchScalarGridSpec(
            num_scalar_prefetch=1,
            grid=(b, n_par, n_tiles),
            in_specs=[pl.BlockSpec(
                (1, c, t_rows, _LANES),
                lambda g, p, t, means: (g, 0, p * n_tiles + t, 0))],
            out_specs=pl.BlockSpec(
                (1, 1, 1, _LANES),
                lambda g, p, t, means: (g, p, 0, 0)),
            scratch_shapes=[pltpu.VMEM((1, _LANES), jnp.float32)],
        ),
        compiler_params=pltpu.CompilerParams(
            dimension_semantics=("parallel", "parallel", "arbitrary"),
            vmem_limit_bytes=_VMEM_LIMIT_BYTES,
        ),
    )(means, xr)


def sa_loss(x: jax.Array, *, fused_block_bytes: int = _TARGET_BLOCK_BYTES) -> jax.Array:
    """x: (B, 3, H, W) NCHW (any float dtype). Returns scalar float32."""
    b, c, h, w = x.shape
    if c != 3:
        raise ValueError("Sa_Loss expects 3 channels (r, g, b)")
    hw = h * w
    rows = _cdiv(hw, _LANES)
    per_batch_bytes = c * rows * _LANES * _F32_BYTES

    xf = x.reshape(b, c, hw)
    if per_batch_bytes <= fused_block_bytes:
        partials = _sa_loss_fused(xf, hw, rows)   # single HBM pass over x
    else:
        partials = _sa_loss_tiled(xf, hw, rows)   # two-pass fallback (huge images)

    # Tiny final reduction in the wrapper (f32): mean over k's B*1*H*W elems.
    return jnp.sum(partials) / jnp.float32(b * hw)


def sa_loss_ref(x: jax.Array) -> jax.Array:
    """Pure-JAX reference mirroring the PyTorch forward."""
    mean_rgb = jnp.mean(x, axis=(2, 3), keepdims=True)
    d = x - mean_rgb
    k = jnp.sqrt(jnp.sum(d * d, axis=1, keepdims=True))
    return jnp.mean(k)


if __name__ == "__main__":
    key = jax.random.PRNGKey(0)
    key0, key1 = jax.random.split(key)

    # Small NCHW input consistent with the module: batch=2, channels=3, 16x16.
    x = jax.random.uniform(key0, (2, 3, 16, 16), dtype=jnp.float32)

    out_fused = jax.block_until_ready(sa_loss(x))                        # fused path
    out_tiled = jax.block_until_ready(sa_loss(x, fused_block_bytes=0))   # force tiled path
    ref = sa_loss_ref(x)
    assert jnp.allclose(out_fused, ref, atol=1e-5, rtol=1e-5), (out_fused, ref)
    assert jnp.allclose(out_tiled, ref, atol=1e-5, rtol=1e-5), (out_tiled, ref)

    # Odd spatial size exercises the in-kernel tail mask (H*W % 128 != 0).
    x_odd = jax.random.uniform(key1, (2, 3, 9, 9), dtype=jnp.float32)
    out_odd = jax.block_until_ready(sa_loss(x_odd))
    ref_odd = sa_loss_ref(x_odd)
    assert jnp.allclose(out_odd, ref_odd, atol=1e-5, rtol=1e-5), (out_odd, ref_odd)

    print("KERNEL_OK")
</pallas_src>

<mosaic_0001>
module attributes {stable_mosaic.version = 11 : i64} {
  func.func @_sa_fused_kernel(%arg0: i32, %arg1: memref<1x3x2x128xf32, #tpu.memory_space<vmem>>, %arg2: memref<1x1x128xf32, #tpu.memory_space<vmem>>) attributes {dimension_semantics = [#tpu.dimension_semantics<parallel>], iteration_bounds = array<i64: 2>, scalar_prefetch = 0 : i64, scratch_operands = 0 : i64, tpu.core_type = #tpu.core_type<tc>, window_params = [{transform_indices = @transform_0, window_bounds = array<i64: 1, 3, 2, 128>}, {transform_indices = @transform_1, window_bounds = array<i64: 1, 1, 128>}]} {
    %cst = arith.constant 0.000000e+00 : f32
    %0 = vector.broadcast %cst : f32 to vector<1x128xf32>
    %c0 = arith.constant 0 : index
    %c0_0 = arith.constant 0 : index
    %c0_1 = arith.constant 0 : index
    %c0_2 = arith.constant 0 : index
    %1 = vector.load %arg1[%c0, %c0_0, %c0_1, %c0_2] : memref<1x3x2x128xf32, #tpu.memory_space<vmem>>, vector<1x1x2x128xf32>
    %2 = vector.shape_cast %1 : vector<1x1x2x128xf32> to vector<2x128xf32>
    %c0_3 = arith.constant 0 : index
    %c1 = arith.constant 1 : index
    %c0_4 = arith.constant 0 : index
    %c0_5 = arith.constant 0 : index
    %3 = vector.load %arg1[%c0_3, %c1, %c0_4, %c0_5] : memref<1x3x2x128xf32, #tpu.memory_space<vmem>>, vector<1x1x2x128xf32>
    %4 = vector.shape_cast %3 : vector<1x1x2x128xf32> to vector<2x128xf32>
    %c0_6 = arith.constant 0 : index
    %c2 = arith.constant 2 : index
    %c0_7 = arith.constant 0 : index
    %c0_8 = arith.constant 0 : index
    %5 = vector.load %arg1[%c0_6, %c2, %c0_7, %c0_8] : memref<1x3x2x128xf32, #tpu.memory_space<vmem>>, vector<1x1x2x128xf32>
    %6 = vector.shape_cast %5 : vector<1x1x2x128xf32> to vector<2x128xf32>
    %7 = vector.shape_cast %2 : vector<2x128xf32> to vector<1x2x128xf32>
    %cst_9 = arith.constant dense<0.000000e+00> : vector<1xf32>
    %8 = vector.multi_reduction <add>, %7, %cst_9 [1, 2] : vector<1x2x128xf32> to vector<1xf32>
    %9 = vector.shape_cast %8 : vector<1xf32> to vector<1x1x1xf32>
    %10 = vector.extract %9[0, 0, 0] : f32 from vector<1x1x1xf32>
    %cst_10 = arith.constant 2.560000e+02 : f32
    %11 = arith.divf %10, %cst_10 : f32
    %12 = vector.shape_cast %4 : vector<2x128xf32> to vector<1x2x128xf32>
    %cst_11 = arith.constant dense<0.000000e+00> : vector<1xf32>
    %13 = vector.multi_reduction <add>, %12, %cst_11 [1, 2] : vector<1x2x128xf32> to vector<1xf32>
    %14 = vector.shape_cast %13 : vector<1xf32> to vector<1x1x1xf32>
    %15 = vector.extract %14[0, 0, 0] : f32 from vector<1x1x1xf32>
    %cst_12 = arith.constant 2.560000e+02 : f32
    %16 = arith.divf %15, %cst_12 : f32
    %17 = vector.shape_cast %6 : vector<2x128xf32> to vector<1x2x128xf32>
    %cst_13 = arith.constant dense<0.000000e+00> : vector<1xf32>
    %18 = vector.multi_reduction <add>, %17, %cst_13 [1, 2] : vector<1x2x128xf32> to vector<1xf32>
    %19 = vector.shape_cast %18 : vector<1xf32> to vector<1x1x1xf32>
    %20 = vector.extract %19[0, 0, 0] : f32 from vector<1x1x1xf32>
    %cst_14 = arith.constant 2.560000e+02 : f32
    %21 = arith.divf %20, %cst_14 : f32
    %22 = vector.broadcast %11 : f32 to vector<2x128xf32>
    %23 = arith.subf %2, %22 : vector<2x128xf32>
    %24 = vector.broadcast %16 : f32 to vector<2x128xf32>
    %25 = arith.subf %4, %24 : vector<2x128xf32>
    %26 = vector.broadcast %21 : f32 to vector<2x128xf32>
    %27 = arith.subf %6, %26 : vector<2x128xf32>
    %28 = arith.mulf %23, %23 : vector<2x128xf32>
    %29 = arith.mulf %25, %25 : vector<2x128xf32>
    %30 = arith.addf %28, %29 : vector<2x128xf32>
    %31 = arith.mulf %27, %27 : vector<2x128xf32>
    %32 = arith.addf %30, %31 : vector<2x128xf32>
    %33 = math.sqrt %32 : vector<2x128xf32>
    %cst_15 = arith.constant dense<0.000000e+00> : vector<128xf32>
    %34 = vector.multi_reduction <add>, %33, %cst_15 [0] : vector<2x128xf32> to vector<128xf32>
    %35 = vector.shape_cast %34 : vector<128xf32> to vector<1x128xf32>
    %36 = arith.addf %0, %35 : vector<1x128xf32>
    %37 = vector.shape_cast %36 : vector<1x128xf32> to vector<1x1x128xf32>
    %c0_16 = arith.constant 0 : index
    %c0_17 = arith.constant 0 : index
    %c0_18 = arith.constant 0 : index
    %38 = vector.load %arg2[%c0_16, %c0_17, %c0_18] : memref<1x1x128xf32, #tpu.memory_space<vmem>>, vector<1x1x128xf32>
    tpu.vector_store %arg2[%c0_16, %c0_17, %c0_18], %37 {strides = array<i32>} : memref<1x1x128xf32, #tpu.memory_space<vmem>>, vector<1x1x128xf32>,
    return
  }
  func.func @transform_0(%arg0: i32) -> (i32, i32, i32, i32) {
    %c0_i32 = arith.constant 0 : i32
    %c0_i32_0 = arith.constant 0 : i32
    %c0_i32_1 = arith.constant 0 : i32
    %c0_i32_2 = arith.constant 0 : i32
    return %arg0, %c0_i32, %c0_i32_0, %c0_i32_1 : i32, i32, i32, i32
  }
  func.func @transform_1(%arg0: i32) -> (i32, i32, i32) {
    %c0_i32 = arith.constant 0 : i32
    %c0_i32_0 = arith.constant 0 : i32
    %c0_i32_1 = arith.constant 0 : i32
    return %arg0, %c0_i32, %c0_i32_0 : i32, i32, i32
  }
}

</mosaic_0001>

<llo_original>
// kernel: tpu_custom_call.1
$region0: #{tpu_custom_call.1}
  #allocation0 [shape = 'u32[]', space=smem, size = 0x4, offset = 0x4, fixed_abs, tag = 'smem constant byte address 0x4 - core index']
  #allocation1 [shape = 'u32[72,128]{1,0:T(1,128)}', space=vmem, size = 0x9000, scoped, tag = 'internal scratch']
  %s0 = inlined_call_operand.hbm [shape: f32[2,3,2,128], index: 0, kind: input, shape index: {}]
  %s1 = inlined_call_operand.hbm [shape: f32[2,1,128], index: 1, kind: output, shape index: {}]
  %s2 = sld [smem:[#allocation0]]
  $region41: #{tpu_custom_call.1} parent=0
    _
  %s4 = ssub.s32 1, %s2
  %s5 = scalar_select 0, %s4, %s2
  $region1: #{tpu_custom_call.1} parent=0
    #allocation2 [shape = 'u8[6144]{0}', space=vmem, size = 0x1800, scoped, tag = 'input window, operand 0']
    #allocation3 [shape = 's32[2]{0}', space=sflag, size = 0x8, scoped, tag = 'scoped memory for tpu_custom_call.1']
    #allocation4 [shape = 's32[2]{0}', space=sflag, size = 0x8, scoped, tag = 'scoped memory for tpu_custom_call.1']
    #allocation5 [shape = 'u8[1024]{0}', space=vmem, size = 0x400, scoped, tag = 'output window, operand 0']
    %6 = vsyncpa [#allocation3], 0
    %s7 = scalar_lea.sflag [#allocation3], 1
    %8 = vsyncpa %s7, 0
    %9 = vsyncpa [#allocation4], 0
    %s10 = scalar_lea.sflag [#allocation4], 1
    %11 = vsyncpa %s10, 0
    loop: start=0, step=1, limit=4
    $region2: #{tpu_custom_call.1} parent=1 // loop_pre_header
      _
    $region3: #{tpu_custom_call.1} parent=1 // loop_header
      %s13 = sphi 0, %s17
      %p14 = scmp.ge.s32.totalorder %s13, 4
      %s23 = sphi 0, %s25
      %s26 = sphi 0, %s23
      %s27 = sphi 0, %s26
      %s43 = sphi 0, %s27
      %s49 = sphi 0, %s51
      %s52 = sphi 0, %s49
      %s53 = sphi 0, %s52
      %s69 = sphi 0, %s53
    $region4: #{tpu_custom_call.1} parent=1 // loop_header_branch
      %16 = sbr.rel (%p14) target = $region8
    $region5: #{tpu_custom_call.1} parent=1 // loop_body
      %s18 = ssub.s32 %s13, 1
      %s19 = ssub.s32 %s13, 2
      %s20 = sadd.s32 %s13, 1
      %s21 = ssub.s32 %s13, %s20
      %p22 = scmp.eq.s32.totalorder %s21, 0
      %s24 = sadd.s32 %s23, 1
      %s25 = scalar_select %p22, %s23, %s24
      %p28 = pneg %p22
      %p29 = scmp.eq.s32.totalorder %s13, 1
      %p30 = por %p28, %p29
      %p31 = scmp.ne.s32.totalorder %s23, %s26
      %p32 = scmp.eq.s32.totalorder %s13, 0
      %p33 = por %p31, %p32
      %p34 = scmp.ne.s32.totalorder %s23, %s26
      %p35 = scmp.eq.s32.totalorder %s18, 1
      %p36 = por %p34, %p35
      %p37 = scmp.ne.s32.totalorder %s26, %s27
      %p38 = scmp.eq.s32.totalorder %s18, 0
      %p39 = por %p37, %p38
      %p40 = scmp.ne.s32.totalorder %s26, %s27
      %p41 = scmp.eq.s32.totalorder %s19, 1
      %p42 = por %p40, %p41
      %p44 = scmp.ne.s32.totalorder %s27, %s43
      %p45 = scmp.eq.s32.totalorder %s19, 0
      %p46 = por %p44, %p45
      %s47 = ssub.s32 %s13, %s20
      %p48 = scmp.eq.s32.totalorder %s47, 0
      %s50 = sadd.s32 %s49, 1
      %s51 = scalar_select %p48, %s49, %s50
      %p54 = pneg %p48
      %p55 = scmp.eq.s32.totalorder %s13, 1
      %p56 = por %p54, %p55
      %p57 = scmp.ne.s32.totalorder %s49, %s52
      %p58 = scmp.eq.s32.totalorder %s13, 0
      %p59 = por %p57, %p58
      %p60 = scmp.ne.s32.totalorder %s49, %s52
      %p61 = scmp.eq.s32.totalorder %s18, 1
      %p62 = por %p60, %p61
      %p63 = scmp.ne.s32.totalorder %s52, %s53
      %p64 = scmp.eq.s32.totalorder %s18, 0
      %p65 = por %p63, %p64
      %p66 = scmp.ne.s32.totalorder %s52, %s53
      %p67 = scmp.eq.s32.totalorder %s19, 1
      %p68 = por %p66, %p67
      %p70 = scmp.ne.s32.totalorder %s53, %s69
      %p71 = scmp.eq.s32.totalorder %s19, 0
      %p72 = por %p70, %p71
      %p73 = scmp.le.s32.totalorder 1, %s13
      %p74 = scmp.lt.s32.totalorder %s13, 3
      %p75 = pnand %p73, %p74
      %p76 = pneg %p75
      // Predicated region
      $region9: #{tpu_custom_call.1} parent=5 // pred_check
        _
      $region10: #{tpu_custom_call.1} parent=5 // pred_check_branch
        %78 = sbr.rel (%p75) target = $region12
      $region11: #{tpu_custom_call.1} parent=5 // pred_region
        %s79 = ssub.s32 %s13, 1
      $region12: #{tpu_custom_call.1} parent=5 // pred_fallthru
        _
      %p80 = scmp.lt.s32.totalorder %s13, 2
      // Predicated region
      $region13: #{tpu_custom_call.1} parent=5 // pred_check
        %p81 = pneg %p80
      $region14: #{tpu_custom_call.1} parent=5 // pred_check_branch
        %83 = sbr.rel (%p81) target = $region16
      $region15: #{tpu_custom_call.1} parent=5 // pred_region
        // Predicated region
        $region17: #{tpu_custom_call.1} parent=15 // pred_check
          %p84 = pneg %p33
        $region18: #{tpu_custom_call.1} parent=15 // pred_check_branch
          %86 = sbr.rel (%p84) target = $region20
        $region19: #{tpu_custom_call.1} parent=15 // pred_region
          %s87 = sand.u32 %s23, 1
          %s88 = scalar_lea.sflag [#allocation3], %s87
          %s89 = sand.u32 %s23, 1
          %s90 = smul.addr %s89, 6
          %s91 = scalar_lea.vmem [#allocation2], %s90
          %93 = vsyncadd %s88, 0
          %s94 = smul.addr %s13, 3
          %s95 = smul.addr %s94, 2
          %s96 = scalar_lea.hbm %s0, %s95
          %s97 = sshll.u32 %s96, 4
          %s98 = int_to_ptr.hbm [resolvable:$true] %s97
          %s99 = sshll.u32 %s91, 4
          %s100 = int_to_ptr.vmem [resolvable:$true] %s99
          %105 = dma.hbm_to_vmem [thread:$0]  %s98, 96, %s100, %s88, 32, 32, 2
        $region20: #{tpu_custom_call.1} parent=15 // pred_fallthru
          _
      $region16: #{tpu_custom_call.1} parent=5 // pred_fallthru
        _
      %p106 = scmp.le.s32.totalorder 1, %s13
      %p107 = scmp.lt.s32.totalorder %s13, 3
      %p108 = pnand %p106, %p107
      %p109 = pneg %p108
      // Predicated region
      $region21: #{tpu_custom_call.1} parent=5 // pred_check
        _
      $region22: #{tpu_custom_call.1} parent=5 // pred_check_branch
        %111 = sbr.rel (%p108) target = $region24
      $region23: #{tpu_custom_call.1} parent=5 // pred_region
        %s112 = ssub.s32 %s13, 1
        %s113 = sand.u32 %s26, 1
        %s114 = scalar_lea.sflag [#allocation3], %s113
        %s115 = sand.u32 %s26, 1
        %s116 = smul.addr %s115, 6
        %s117 = scalar_lea.vmem [#allocation2], %s116
        // Predicated region
        $region25: #{tpu_custom_call.1} parent=23 // pred_check
          %p118 = pneg %p39
        $region26: #{tpu_custom_call.1} parent=23 // pred_check_branch
          %120 = sbr.rel (%p118) target = $region28
        $region27: #{tpu_custom_call.1} parent=23 // pred_region
          %122 = dma.done %s114, 96
        $region28: #{tpu_custom_call.1} parent=23 // pred_fallthru
          _
        %s123 = sand.u32 %s26, 1
        %s124 = scalar_lea.sflag [#allocation3], %s123
        %s125 = sand.u32 %s26, 1
        %s126 = smul.addr %s125, 6
        %s127 = scalar_lea.vmem [#allocation2], %s126
        %p128 = pneg %p39
        %p129 = pneg %p36
        %p130 = pneg %p65
        %p131 = pneg %p62
        %s132 = sand.u32 %s52, 1
        %s133 = scalar_lea.sflag [#allocation4], %s132
        %s134 = sand.u32 %s52, 1
        %s135 = scalar_lea.vmem [#allocation5], %s134
        %v136 = vld [vmem:[%s117] sm:$0x3]
        %s137 = scalar_lea.vmem %s117, 2 [#allocation2]
        %v138 = vld [vmem:[%s137] sm:$0x3]
        %s139 = scalar_lea.vmem %s117, 4 [#allocation2]
        %v140 = vld [vmem:[%s139] sm:$0x3]
        %vm141 = vcmask 1041408
        %v142 = vsel %vm141, %v136, 0.0
        %143 = vadd.xlane.f32.xlu0 %v142
        %v144 = vpop.xlane.xlu0 %143
        %v145 = vrot.slane %v144, 4
        %v146 = vadd.f32 %v144, %v145
        %v147 = vrot.slane %v146, 2
        %v148 = vadd.f32 %v146, %v147
        %v149 = vrot.slane %v148, 1
        %v150 = vadd.f32 %v148, %v149
        %s151 = vtos %v150
        %v152 = vrcp.pop 256.0
        %v153 = vmul.f32 256.0, %v152
        %v154 = vsub.f32 1.0, %v153
        %v155 = vmul.f32 %v152, %v154
        %v156 = vadd.f32 %v152, %v155
        %vm157 = vweird.f32 %v152
        %v158 = vsel %vm157, %v152, %v156
        %s159 = vtos %v158
        %s160 = smul.f32 %s151, %s159
        %v161 = vsel %vm141, %v138, 0.0
        %162 = vadd.xlane.f32.xlu0 %v161
        %v163 = vpop.xlane.xlu0 %162
        %v164 = vrot.slane %v163, 4
        %v165 = vadd.f32 %v163, %v164
        %v166 = vrot.slane %v165, 2
        %v167 = vadd.f32 %v165, %v166
        %v168 = vrot.slane %v167, 1
        %v169 = vadd.f32 %v167, %v168
        %s170 = vtos %v169
        %v171 = vrcp.pop 256.0
        %v172 = vmul.f32 256.0, %v171
        %v173 = vsub.f32 1.0, %v172
        %v174 = vmul.f32 %v171, %v173
        %v175 = vadd.f32 %v171, %v174
        %vm176 = vweird.f32 %v171
        %v177 = vsel %vm176, %v171, %v175
        %s178 = vtos %v177
        %s179 = smul.f32 %s170, %s178
        %v180 = vsel %vm141, %v140, 0.0
        %181 = vadd.xlane.f32.xlu0 %v180
        %v182 = vpop.xlane.xlu0 %181
        %v183 = vrot.slane %v182, 4
        %v184 = vadd.f32 %v182, %v183
        %v185 = vrot.slane %v184, 2
        %v186 = vadd.f32 %v184, %v185
        %v187 = vrot.slane %v186, 1
        %v188 = vadd.f32 %v186, %v187
        %s189 = vtos %v188
        %v190 = vrcp.pop 256.0
        %v191 = vmul.f32 256.0, %v190
        %v192 = vsub.f32 1.0, %v191
        %v193 = vmul.f32 %v190, %v192
        %v194 = vadd.f32 %v190, %v193
        %vm195 = vweird.f32 %v190
        %v196 = vsel %vm195, %v190, %v194
        %s197 = vtos %v196
        %s198 = smul.f32 %s189, %s197
        %v199 = vstv %s160
        %v200 = vsub.f32 %v136, %v199
        %v201 = vstv %s179
        %v202 = vsub.f32 %v138, %v201
        %v203 = vstv %s198
        %v204 = vsub.f32 %v140, %v203
        %v205 = vmul.f32 %v200, %v200
        %v206 = vmul.f32 %v202, %v202
        %v207 = vadd.f32 %v205, %v206
        %v208 = vmul.f32 %v204, %v204
        %v209 = vadd.f32 %v207, %v208
        %v210 = vrsqrt.pop %v209
        %v211 = vmul.f32 %v210, %v209
        %v212 = vmul.f32 %v211, %v210
        %v213 = vmul.f32 0.5, %v212
        %v214 = vsub.f32 1.5, %v213
        %v215 = vmul.f32 %v210, %v214
        %v216 = vmul.f32 %v209, %v215
        %vm217 = vcmp.eq.f32.partialorder %v209, inf
        %v218 = vsel %vm217, %v209, %v216
        %vm219 = vcmp.eq.f32.partialorder %v209, 0.0
        %v220 = vand.u32 %v209, 2147483648
        %v221 = vsel %vm219, %v220, %v218
        %v222 = vsel %vm141, %v221, 0.0
        %v223 = vrot.slane %v222, 4
        %v224 = vadd.f32 %v222, %v223
        %v225 = vrot.slane %v224, 2
        %v226 = vadd.f32 %v224, %v225
        %v227 = vrot.slane %v226, 1
        %v228 = vadd.f32 %v226, %v227
        %v229 = vadd.f32 %v228, 0.0
        %230 = vst [vmem:[%s135] sm:$0x1] %v229
        %s231 = sand.u32 %s52, 1
        %s232 = scalar_lea.sflag [#allocation4], %s231
        %s233 = sand.u32 %s52, 1
        %s234 = scalar_lea.vmem [#allocation5], %s233
        // Predicated region
        $region29: #{tpu_custom_call.1} parent=23 // pred_check
          %p235 = pneg %p62
        $region30: #{tpu_custom_call.1} parent=23 // pred_check_branch
          %237 = sbr.rel (%p235) target = $region32
        $region31: #{tpu_custom_call.1} parent=23 // pred_region
          %239 = vsyncadd %s232, 0
          %s240 = scalar_lea.hbm %s1, %s18
          %s242 = sshll.u32 %s234, 4
          %s243 = int_to_ptr.vmem [resolvable:$true] %s242
          %s244 = sshll.u32 %s240, 4
          %s245 = int_to_ptr.hbm [resolvable:$true] %s244
          %247 = dma.vmem_to_hbm [thread:$0]  %s243, 16, %s245, %s232
        $region32: #{tpu_custom_call.1} parent=23 // pred_fallthru
          _
      $region24: #{tpu_custom_call.1} parent=5 // pred_fallthru
        _
      %p248 = scmp.le.s32.totalorder 2, %s13
      // Predicated region
      $region33: #{tpu_custom_call.1} parent=5 // pred_check
        %p249 = pneg %p248
      $region34: #{tpu_custom_call.1} parent=5 // pred_check_branch
        %251 = sbr.rel (%p249) target = $region36
      $region35: #{tpu_custom_call.1} parent=5 // pred_region
        %s252 = ssub.s32 %s13, 2
        // Predicated region
        $region37: #{tpu_custom_call.1} parent=35 // pred_check
          %p253 = pneg %p68
        $region38: #{tpu_custom_call.1} parent=35 // pred_check_branch
          %255 = sbr.rel (%p253) target = $region40
        $region39: #{tpu_custom_call.1} parent=35 // pred_region
          %s256 = sand.u32 %s53, 1
          %s257 = scalar_lea.sflag [#allocation4], %s256
          %s258 = sand.u32 %s53, 1
          %s259 = scalar_lea.vmem [#allocation5], %s258
          %261 = dma.done %s257, 16
        $region40: #{tpu_custom_call.1} parent=35 // pred_fallthru
          _
      $region36: #{tpu_custom_call.1} parent=5 // pred_fallthru
        _
    $region6: #{tpu_custom_call.1} parent=1 // loop_footer
      %s17 = sadd.s32 1, %s13
    $region7: #{tpu_custom_call.1} parent=1 // loop_footer_branch
      %12 = sbr.rel target = $region3
    $region8: #{tpu_custom_call.1} parent=1 // loop_exit
      _
    %262 = vsyncpa [#allocation3], 1
    %s263 = scalar_lea.sflag [#allocation3], 1
    %264 = vsyncpa %s263, 1
    %265 = vsyncpa [#allocation4], 1
    %s266 = scalar_lea.sflag [#allocation4], 1
    %267 = vsyncpa %s266, 1

</llo_original>
